<compile_context>
chip_gen: v7x
topology: tpu7x:2x2x1
jax: 0.10.0
libtpu: 0.0.40
codegen_flags: <defaults>
</compile_context>

<pallas_src>
import jax
import jax.numpy as jnp
from jax.experimental import pallas as pl
from jax.experimental.pallas import tpu as pltpu

IN_DIM, H1_DIM, H2_DIM = 20, 64, 32
PACK = 2  # batch rows packed per LHS row


def _round_up(n, m):
    return ((n + m - 1) // m) * m


def _block_diag2(w):
    """blockdiag(w, w) without scipy: (r, c) -> (2r, 2c)."""
    r, c = w.shape
    z = jnp.zeros((r, c), w.dtype)
    top = jnp.concatenate([w, z], axis=1)
    bot = jnp.concatenate([z, w], axis=1)
    return jnp.concatenate([top, bot], axis=0)


def pack_params(params):
    """One-time device-param prep (hoisted out of the jitted forward path)."""
    w1 = params["w1"]                       # (20, 64)
    w2 = params["w2"]                       # (64, 32)
    w3 = params["w3"].reshape(1, H2_DIM)    # (1, 32)
    b1 = params["b1"].reshape(1, -1)
    b2 = params["b2"].reshape(1, -1)
    b3 = params["b3"].reshape(1, 1)

    zrow = jnp.zeros((1, H2_DIM), jnp.float32)
    return dict(
        # MXU operands in bf16 (f32 accumulation inside the kernel).
        w1=_block_diag2(w1).astype(jnp.bfloat16),                       # (40, 128)
        w2=_block_diag2(w2).astype(jnp.bfloat16),                       # (128, 64)
        # Biases / layer-3 weights stay f32 on the VPU.
        b1=jnp.concatenate([b1, b1], axis=-1).astype(jnp.float32),      # (1, 128)
        b2=jnp.concatenate([b2, b2], axis=-1).astype(jnp.float32),      # (1, 64)
        # Row 0 selects the even-batch half of h2, row 1 the odd half.
        w3=jnp.concatenate(
            [jnp.concatenate([w3, zrow], axis=-1),
             jnp.concatenate([zrow, w3], axis=-1)], axis=0
        ).astype(jnp.float32),                                          # (2, 64)
        b3=b3.astype(jnp.float32),                                      # (1, 1)
    )


def _mlp_kernel(x_ref, w1_ref, b1_ref, w2_ref, b2_ref, w3_ref, b3_ref, o_ref):
    """One packed batch tile: (tile_p, 40) f32 -> lane-dense (1, 2, tile_p)."""
    # In-kernel bf16 cast (no separate XLA cast pass over HBM).
    x = x_ref[...].astype(jnp.bfloat16)                               # (tile_p, 40)

    # Layer 1: MXU, block-diagonal weights => both packed rows in one push.
    h1 = jnp.dot(x, w1_ref[...], preferred_element_type=jnp.float32)  # (tile_p, 128)
    h1 = jnp.maximum(h1 + b1_ref[...], 0.0)

    # Layer 2: MXU, block-diagonal weights.
    h2 = jnp.dot(h1.astype(jnp.bfloat16), w2_ref[...],
                 preferred_element_type=jnp.float32)                  # (tile_p, 64)
    h2 = jnp.maximum(h2 + b2_ref[...], 0.0)

    # Layer 3 (out_features == 1): keep off the MXU.  Full-lane-width VPU
    # multiplies against zero-masked w3 rows + XLU lane reductions give the
    # even / odd halves separately (no narrow sub-tile slicing of h2).
    # TODO(synk): if a bundle dump shows this tail binding on v6e/v7x after the
    # MXU-push halving, reduce per 64-lane group / transpose in full tiles.
    w3 = w3_ref[...]                                                  # (2, 64)
    s_even = jnp.sum(h2 * w3[0:1, :], axis=-1)                        # (tile_p,)
    s_odd = jnp.sum(h2 * w3[1:2, :], axis=-1)                         # (tile_p,)

    out = jnp.stack([s_even, s_odd], axis=0) + b3_ref[...]            # (2, tile_p)
    # Lane-dense store: packed-row index on the lane axis.
    o_ref[...] = out[None, :, :].astype(o_ref.dtype)


def trading_model_forward(x, packed, *, max_tile_p=1024):
    """x: (B, 20) float32.  packed: output of pack_params().  Returns (B, 1)."""
    B = x.shape[0]

    # Odd batch: pad one row so the 2-row packing reshape is exact (rare path).
    if B % 2:
        x = jnp.pad(x, ((0, 1), (0, 0)))
    xp = x.reshape(-1, PACK * IN_DIM)        # (P, 40) -- free row-major reshape
    P = xp.shape[0]

    if P < 256:
        # Tiny batch: single block; pad the (tiny) packed array to a sublane
        # multiple instead of relying on partial-block handling.
        tile_p = _round_up(P, 8)
        if tile_p != P:
            xp = jnp.pad(xp, ((0, tile_p - P), (0, 0)))
        num_blocks = 1
    else:
        # >= 2 grid steps (so v7x can split across TensorCores), lane-dense
        # (multiple of 128) tiles; the ragged last block is handled by Pallas
        # partial-block handling -- its garbage tail rows are dropped below.
        tile_p = min(max_tile_p, _round_up(pl.cdiv(P, PACK), 128))
        num_blocks = pl.cdiv(P, tile_p)

    w1p, b1p = packed["w1"], packed["b1"]
    w2p, b2p = packed["w2"], packed["b2"]
    w3p, b3p = packed["w3"], packed["b3"]

    def const(shape):
        # Constant index_map => DMA'd once, resident in VMEM across the grid.
        return pl.BlockSpec(shape, lambda i: (0, 0))

    flops = 2 * B * (IN_DIM * H1_DIM + H1_DIM * H2_DIM + H2_DIM)
    weight_bytes = sum(int(a.size) * a.dtype.itemsize
                       for a in (w1p, b1p, w2p, b2p, w3p, b3p))
    bytes_accessed = int(xp.size) * 4 + B * 4 + weight_bytes

    out = pl.pallas_call(
        _mlp_kernel,
        out_shape=jax.ShapeDtypeStruct((num_blocks, 2, tile_p), jnp.float32),
        grid=(num_blocks,),
        in_specs=[
            pl.BlockSpec((tile_p, PACK * IN_DIM), lambda i: (i, 0)),  # streamed x
            const(w1p.shape), const(b1p.shape),
            const(w2p.shape), const(b2p.shape),
            const(w3p.shape), const(b3p.shape),
        ],
        out_specs=pl.BlockSpec((1, 2, tile_p), lambda i: (i, 0, 0)),
        compiler_params=pltpu.CompilerParams(
            # Batch tiles are independent.  TODO(synk): try pltpu.CORE_PARALLEL
            # on v7x; plain "parallel" is kept for portability across v5e/v6e.
            dimension_semantics=("parallel",),
        ),
        cost_estimate=pl.CostEstimate(
            flops=flops, transcendentals=0, bytes_accessed=bytes_accessed),
    )(xp, w1p, b1p, w2p, b2p, w3p, b3p)

    # out[i, j, p] = result for original row 2*(i*tile_p + p) + j.
    # Interleave even/odd halves (tiny (B,)-sized transpose), drop padding.
    y = out.transpose(0, 2, 1).reshape(-1)[:B]
    return y.reshape(B, 1)


def init_params(key):
    """Deterministic init mimicking PyTorch Linear default (U(+/- 1/sqrt(fan_in)))."""
    dims = [(IN_DIM, H1_DIM), (H1_DIM, H2_DIM), (H2_DIM, 1)]
    params = {}
    for i, (fan_in, fan_out) in enumerate(dims, start=1):
        key, kw, kb = jax.random.split(key, 3)
        bound = 1.0 / (fan_in ** 0.5)
        params[f"w{i}"] = jax.random.uniform(
            kw, (fan_in, fan_out), jnp.float32, minval=-bound, maxval=bound)
        params[f"b{i}"] = jax.random.uniform(
            kb, (1, fan_out), jnp.float32, minval=-bound, maxval=bound)
    return params


def _reference(x, p):
    h = jnp.maximum(x @ p["w1"] + p["b1"], 0.0)
    h = jnp.maximum(h @ p["w2"] + p["b2"], 0.0)
    return h @ p["w3"] + p["b3"]


if __name__ == "__main__":
    key = jax.random.PRNGKey(0)
    key, kx = jax.random.split(key)
    params = init_params(key)
    packed = pack_params(params)  # one-time device-param prep (not per call)

    fwd = jax.jit(trading_model_forward)

    # Small batch (module's intended usage): exercises the tiny-batch path.
    batch = 8
    x = jax.random.normal(kx, (batch, IN_DIM), dtype=jnp.float32)
    out = jax.block_until_ready(fwd(x, packed))
    ref = _reference(x, params)
    assert out.shape == (batch, 1), out.shape
    # bf16 matmul inputs (f32 accumulation) => loosened tolerance vs f32 reference.
    assert jnp.allclose(out, ref, atol=3e-2, rtol=3e-2), "mismatch vs reference (B=8)"

    # Larger, non-tile-multiple batch: multi-step grid + partial last block.
    key, kx2 = jax.random.split(key)
    batch2 = 2500
    x2 = jax.random.normal(kx2, (batch2, IN_DIM), dtype=jnp.float32)
    out2 = jax.block_until_ready(fwd(x2, packed))
    ref2 = _reference(x2, params)
    assert out2.shape == (batch2, 1), out2.shape
    assert jnp.allclose(out2, ref2, atol=3e-2, rtol=3e-2), "mismatch vs reference (B=2500)"

    print("KERNEL_OK")
</pallas_src>

<mosaic_0001>
module attributes {stable_mosaic.version = 11 : i64} {
  func.func @_mlp_kernel(%arg0: i32, %arg1: memref<8x40xf32, #tpu.memory_space<vmem>>, %arg2: memref<40x128xbf16, #tpu.memory_space<vmem>>, %arg3: memref<1x128xf32, #tpu.memory_space<vmem>>, %arg4: memref<128x64xbf16, #tpu.memory_space<vmem>>, %arg5: memref<1x64xf32, #tpu.memory_space<vmem>>, %arg6: memref<2x64xf32, #tpu.memory_space<vmem>>, %arg7: memref<1x1xf32, #tpu.memory_space<vmem>>, %arg8: memref<1x2x8xf32, #tpu.memory_space<vmem>>) attributes {dimension_semantics = [#tpu.dimension_semantics<parallel>], iteration_bounds = array<i64: 1>, scalar_prefetch = 0 : i64, scratch_operands = 0 : i64, tpu.core_type = #tpu.core_type<tc>, window_params = [{transform_indices = @transform_0, window_bounds = array<i64: 8, 40>}, {pipeline_mode = #tpu.pipeline_mode<synchronous>, transform_indices = @transform_1, window_bounds = array<i64: 40, 128>}, {pipeline_mode = #tpu.pipeline_mode<synchronous>, transform_indices = @transform_2, window_bounds = array<i64: 1, 128>}, {pipeline_mode = #tpu.pipeline_mode<synchronous>, transform_indices = @transform_3, window_bounds = array<i64: 128, 64>}, {pipeline_mode = #tpu.pipeline_mode<synchronous>, transform_indices = @transform_4, window_bounds = array<i64: 1, 64>}, {pipeline_mode = #tpu.pipeline_mode<synchronous>, transform_indices = @transform_5, window_bounds = array<i64: 2, 64>}, {pipeline_mode = #tpu.pipeline_mode<synchronous>, transform_indices = @transform_6, window_bounds = array<i64: 1, 1>}, {transform_indices = @transform_7, window_bounds = array<i64: 1, 2, 8>}]} {
    %c0 = arith.constant 0 : index
    %c0_0 = arith.constant 0 : index
    %0 = vector.load %arg1[%c0, %c0_0] : memref<8x40xf32, #tpu.memory_space<vmem>>, vector<8x40xf32>
    %1 = arith.truncf %0 : vector<8x40xf32> to vector<8x40xbf16>
    %c0_1 = arith.constant 0 : index
    %c0_2 = arith.constant 0 : index
    %2 = vector.load %arg2[%c0_1, %c0_2] : memref<40x128xbf16, #tpu.memory_space<vmem>>, vector<40x128xbf16>
    %cst = arith.constant dense<0.000000e+00> : vector<8x128xf32>
    %3 = tpu.matmul %1, %2, %cst {dimension_numbers = #tpu.dot_dimension_numbers<[1], [0], [0], [1], [0, 0, 1, 1], [], []>} : vector<8x40xbf16>, vector<40x128xbf16>, vector<8x128xf32> -> vector<8x128xf32>
    %c0_3 = arith.constant 0 : index
    %c0_4 = arith.constant 0 : index
    %4 = vector.load %arg3[%c0_3, %c0_4] : memref<1x128xf32, #tpu.memory_space<vmem>>, vector<1x128xf32>
    %5 = vector.broadcast %4 : vector<1x128xf32> to vector<8x128xf32>
    %6 = arith.addf %3, %5 : vector<8x128xf32>
    %cst_5 = arith.constant 0.000000e+00 : f32
    %7 = vector.broadcast %cst_5 : f32 to vector<8x128xf32>
    %8 = arith.maximumf %6, %7 : vector<8x128xf32>
    %9 = arith.truncf %8 : vector<8x128xf32> to vector<8x128xbf16>
    %c0_6 = arith.constant 0 : index
    %c0_7 = arith.constant 0 : index
    %10 = vector.load %arg4[%c0_6, %c0_7] : memref<128x64xbf16, #tpu.memory_space<vmem>>, vector<128x64xbf16>
    %cst_8 = arith.constant dense<0.000000e+00> : vector<8x64xf32>
    %11 = tpu.matmul %9, %10, %cst_8 {dimension_numbers = #tpu.dot_dimension_numbers<[1], [0], [0], [1], [0, 0, 1, 1], [], []>} : vector<8x128xbf16>, vector<128x64xbf16>, vector<8x64xf32> -> vector<8x64xf32>
    %c0_9 = arith.constant 0 : index
    %c0_10 = arith.constant 0 : index
    %12 = vector.load %arg5[%c0_9, %c0_10] : memref<1x64xf32, #tpu.memory_space<vmem>>, vector<1x64xf32>
    %13 = vector.broadcast %12 : vector<1x64xf32> to vector<8x64xf32>
    %14 = arith.addf %11, %13 : vector<8x64xf32>
    %cst_11 = arith.constant 0.000000e+00 : f32
    %15 = vector.broadcast %cst_11 : f32 to vector<8x64xf32>
    %16 = arith.maximumf %14, %15 : vector<8x64xf32>
    %c0_12 = arith.constant 0 : index
    %c0_13 = arith.constant 0 : index
    %17 = vector.load %arg6[%c0_12, %c0_13] : memref<2x64xf32, #tpu.memory_space<vmem>>, vector<2x64xf32>
    %18 = vector.extract_strided_slice %17 {offsets = [0, 0], sizes = [1, 64], strides = [1, 1]} : vector<2x64xf32> to vector<1x64xf32>
    %19 = vector.broadcast %18 : vector<1x64xf32> to vector<8x64xf32>
    %20 = arith.mulf %16, %19 : vector<8x64xf32>
    %cst_14 = arith.constant dense<0.000000e+00> : vector<8xf32>
    %21 = vector.multi_reduction <add>, %20, %cst_14 [1] : vector<8x64xf32> to vector<8xf32>
    %22 = vector.extract_strided_slice %17 {offsets = [1, 0], sizes = [1, 64], strides = [1, 1]} : vector<2x64xf32> to vector<1x64xf32>
    %23 = vector.broadcast %22 : vector<1x64xf32> to vector<8x64xf32>
    %24 = arith.mulf %16, %23 : vector<8x64xf32>
    %cst_15 = arith.constant dense<0.000000e+00> : vector<8xf32>
    %25 = vector.multi_reduction <add>, %24, %cst_15 [1] : vector<8x64xf32> to vector<8xf32>
    %26 = vector.shape_cast %21 : vector<8xf32> to vector<1x8xf32>
    %27 = vector.shape_cast %25 : vector<8xf32> to vector<1x8xf32>
    %28 = tpu.concatenate %26, %27 in 0 : vector<1x8xf32>, vector<1x8xf32> -> vector<2x8xf32>
    %c0_16 = arith.constant 0 : index
    %c0_17 = arith.constant 0 : index
    %29 = vector.load %arg7[%c0_16, %c0_17] : memref<1x1xf32, #tpu.memory_space<vmem>>, vector<1x1xf32>
    %30 = vector.broadcast %29 : vector<1x1xf32> to vector<2x8xf32>
    %31 = arith.addf %28, %30 : vector<2x8xf32>
    %32 = vector.shape_cast %31 : vector<2x8xf32> to vector<1x2x8xf32>
    %c0_18 = arith.constant 0 : index
    %c0_19 = arith.constant 0 : index
    %c0_20 = arith.constant 0 : index
    %33 = vector.load %arg8[%c0_18, %c0_19, %c0_20] : memref<1x2x8xf32, #tpu.memory_space<vmem>>, vector<1x2x8xf32>
    tpu.vector_store %arg8[%c0_18, %c0_19, %c0_20], %32 {strides = array<i32>} : memref<1x2x8xf32, #tpu.memory_space<vmem>>, vector<1x2x8xf32>,
    return
  }
  func.func @transform_0(%arg0: i32) -> (i32, i32) {
    %c0_i32 = arith.constant 0 : i32
    %c0_i32_0 = arith.constant 0 : i32
    return %arg0, %c0_i32 : i32, i32
  }
  func.func @transform_1(%arg0: i32) -> (i32, i32) {
    %c0_i32 = arith.constant 0 : i32
    %c0_i32_0 = arith.constant 0 : i32
    %c0_i32_1 = arith.constant 0 : i32
    return %c0_i32, %c0_i32_0 : i32, i32
  }
  func.func @transform_2(%arg0: i32) -> (i32, i32) {
    %c0_i32 = arith.constant 0 : i32
    %c0_i32_0 = arith.constant 0 : i32
    %c0_i32_1 = arith.constant 0 : i32
    return %c0_i32, %c0_i32_0 : i32, i32
  }
  func.func @transform_3(%arg0: i32) -> (i32, i32) {
    %c0_i32 = arith.constant 0 : i32
    %c0_i32_0 = arith.constant 0 : i32
    %c0_i32_1 = arith.constant 0 : i32
    return %c0_i32, %c0_i32_0 : i32, i32
  }
  func.func @transform_4(%arg0: i32) -> (i32, i32) {
    %c0_i32 = arith.constant 0 : i32
    %c0_i32_0 = arith.constant 0 : i32
    %c0_i32_1 = arith.constant 0 : i32
    return %c0_i32, %c0_i32_0 : i32, i32
  }
  func.func @transform_5(%arg0: i32) -> (i32, i32) {
    %c0_i32 = arith.constant 0 : i32
    %c0_i32_0 = arith.constant 0 : i32
    %c0_i32_1 = arith.constant 0 : i32
    return %c0_i32, %c0_i32_0 : i32, i32
  }
  func.func @transform_6(%arg0: i32) -> (i32, i32) {
    %c0_i32 = arith.constant 0 : i32
    %c0_i32_0 = arith.constant 0 : i32
    %c0_i32_1 = arith.constant 0 : i32
    return %c0_i32, %c0_i32_0 : i32, i32
  }
  func.func @transform_7(%arg0: i32) -> (i32, i32, i32) {
    %c0_i32 = arith.constant 0 : i32
    %c0_i32_0 = arith.constant 0 : i32
    %c0_i32_1 = arith.constant 0 : i32
    return %arg0, %c0_i32, %c0_i32_0 : i32, i32, i32
  }
}

</mosaic_0001>

<llo_original>
// kernel: trading_model_forward.1
$region0: #{trading_model_forward.1}
  #allocation0 [shape = 'u32[]', space=smem, size = 0x4, offset = 0x4, fixed_abs, tag = 'smem constant byte address 0x4 - core index']
  #allocation1 [shape = 'u32[144,128]{1,0:T(1,128)}', space=vmem, size = 0x12000, scoped, tag = 'internal scratch']
  #allocation2 [shape = 'f32[1,1]{1,0:T(1,128)S(1)}', space=vmem, size = 0x200, scoped, tag = 'scoped memory for trading_model_forward.1']
  %s0 = inlined_call_operand.vmem [shape: f32[8,40], index: 0, kind: input, shape index: {}]
  %s1 = inlined_call_operand.vmem [shape: bf16[40,128], index: 1, kind: input, shape index: {}]
  %s2 = inlined_call_operand.vmem [shape: f32[1,128], index: 2, kind: input, shape index: {}]
  %s3 = inlined_call_operand.vmem [shape: bf16[128,64], index: 3, kind: input, shape index: {}]
  %s4 = inlined_call_operand.vmem [shape: f32[1,64], index: 4, kind: input, shape index: {}]
  %s5 = inlined_call_operand.vmem [shape: f32[2,64], index: 5, kind: input, shape index: {}]
  %s6 = inlined_call_operand.<no memory space> [shape: f32[1,1], index: 6, kind: input, shape index: {}]
  %s7 = inlined_call_operand.vmem [shape: f32[1,2,8], index: 7, kind: output, shape index: {}]
  %s8 = sld [smem:[#allocation0]]
  $region38: #{trading_model_forward.1} parent=0
    _
  %s10 = ssub.s32 1, %s8
  %s11 = scalar_select 0, %s10, %s8
  %v12 = vstv %s6
  %13 = vst [vmem:[#allocation2] sm:$0x1] %v12
  // Predicated region
  $region2: #{trading_model_forward.1} parent=0 // pred_check
    _
  $region3: #{trading_model_forward.1} parent=0 // pred_check_branch
    %15 = sbr.rel (0) target = $region5
  $region4: #{trading_model_forward.1} parent=0 // pred_region
    _
  $region5: #{trading_model_forward.1} parent=0 // pred_fallthru
    _
  // Predicated region
  $region6: #{trading_model_forward.1} parent=0 // pred_check
    _
  $region7: #{trading_model_forward.1} parent=0 // pred_check_branch
    %17 = sbr.rel (0) target = $region9
  $region8: #{trading_model_forward.1} parent=0 // pred_region
    _
  $region9: #{trading_model_forward.1} parent=0 // pred_fallthru
    _
  // Predicated region
  $region10: #{trading_model_forward.1} parent=0 // pred_check
    _
  $region11: #{trading_model_forward.1} parent=0 // pred_check_branch
    %19 = sbr.rel (0) target = $region13
  $region12: #{trading_model_forward.1} parent=0 // pred_region
    _
  $region13: #{trading_model_forward.1} parent=0 // pred_fallthru
    _
  // Predicated region
  $region14: #{trading_model_forward.1} parent=0 // pred_check
    _
  $region15: #{trading_model_forward.1} parent=0 // pred_check_branch
    %21 = sbr.rel (0) target = $region17
  $region16: #{trading_model_forward.1} parent=0 // pred_region
    _
  $region17: #{trading_model_forward.1} parent=0 // pred_fallthru
    _
  // Predicated region
  $region18: #{trading_model_forward.1} parent=0 // pred_check
    _
  $region19: #{trading_model_forward.1} parent=0 // pred_check_branch
    %23 = sbr.rel (0) target = $region21
  $region20: #{trading_model_forward.1} parent=0 // pred_region
    _
  $region21: #{trading_model_forward.1} parent=0 // pred_fallthru
    _
  // Predicated region
  $region22: #{trading_model_forward.1} parent=0 // pred_check
    _
  $region23: #{trading_model_forward.1} parent=0 // pred_check_branch
    %25 = sbr.rel (0) target = $region25
  $region24: #{trading_model_forward.1} parent=0 // pred_region
    _
  $region25: #{trading_model_forward.1} parent=0 // pred_fallthru
    _
  // Predicated region
  $region26: #{trading_model_forward.1} parent=0 // pred_check
    _
  $region27: #{trading_model_forward.1} parent=0 // pred_check_branch
    %27 = sbr.rel (0) target = $region29
  $region28: #{trading_model_forward.1} parent=0 // pred_region
    _
  $region29: #{trading_model_forward.1} parent=0 // pred_fallthru
    _
  %v29 = vld [vmem:[%s0] sm:$0xff]
  %v30 = vpack.c.bf16 %v29, %v29
  %v31 = vld [vmem:[%s1] sm:$0xf]
  %v32 = vld [vmem:[%s1 + $0x4] sm:$0xf]
  %v33 = vld [vmem:[%s1 + $0x8] sm:$0xf]
  %v34 = vld [vmem:[%s1 + $0xc] sm:$0xf]
  %v35 = vld [vmem:[%s1 + $0x10] sm:$0xf]
  %v36 = vld [vmem:[%s2] sm:$0x1]
  %v38 = vlaneseq
  %v39 = vshrl.u32 %v38, 7
  %v40 = vsub.s32 0, %v39
  %v41 = vrot.slane %v36, %v40
  %v48 = vunpack.c.l.b16 %v31
  %v49 = vunpack.c.l.b16 %v32
  %v50 = vunpack.c.l.b16 %v33
  %v51 = vunpack.c.l.b16 %v34
  %v52 = vunpack.c.l.b16 %v35
  %v53 = vpack.c.b16 %v49, %v48
  %v54 = vpack.c.b16 %v51, %v50
  %v55 = vpack.c.b16 %v52, %v52
  %vm58 = vcmask 326656
  %v60 = vsel %vm58, %v30, 0
  %vm62 = vcmask 1043456
  %v64 = vsel %vm62, %v55, 0
  %66 = vmatprep.subr.bf16.mxu0 0
  %67 = vmatpush1.bf16.msra.mxu0 %v53
  %68 = vmatprep.subr.bf16.mxu0 0
  %69 = vmatpush1.bf16.msra.mxu0 %v54
  %70 = vmatprep.subr.bf16.mxu0 0
  %71 = vmatpush1.bf16.msra.mxu0 %v64
  %72 = vmatprep.subr.bf16.mxu0 0
  %73 = vmatpush1.bf16.msra.mxu0 0
  %74 = vmatprep.subr.bf16.mxu0 0
  %75 = vmatpush1.bf16.msra.mxu0 0
  %76 = vmatprep.subr.bf16.mxu0 0
  %77 = vmatpush1.bf16.msra.mxu0 0
  %78 = vmatprep.subr.bf16.mxu0 0
  %79 = vmatpush1.bf16.msra.mxu0 0
  %80 = vmatprep.subr.bf16.mxu0 0
  %81 = vmatpush1.bf16.msra.mxu0 0
  %82 = vmatprep.subr.bf16.mxu0 0
  %83 = vmatpush1.bf16.msra.mxu0 0
  %84 = vmatprep.subr.bf16.mxu0 0
  %85 = vmatpush1.bf16.msra.mxu0 0
  %86 = vmatprep.subr.bf16.mxu0 0
  %87 = vmatpush1.bf16.msra.mxu0 0
  %88 = vmatprep.subr.bf16.mxu0 0
  %89 = vmatpush1.bf16.msra.mxu0 0
  %90 = vmatprep.subr.bf16.mxu0 0
  %91 = vmatpush1.bf16.msra.mxu0 0
  %92 = vmatprep.subr.bf16.mxu0 0
  %93 = vmatpush1.bf16.msra.mxu0 0
  %94 = vmatprep.subr.bf16.mxu0 0
  %95 = vmatpush1.bf16.msra.mxu0 0
  %96 = vmatprep.subr.bf16.mxu0 0
  %97 = vmatpush1.bf16.msra.mxu0 0
  %98 = vmatprep.mubr.bf16.mxu0 0
  %99 = vmatmul.mubr.bf16.gmra.mrb[0].mxu0 %v60
  %v100 = vpop.f32.mrb[0].mxu0
  %v101 = vadd.f32 %v41, %v100
  %v102 = vpop.f32.mrb[0].mxu0
  %v103 = vpop.f32.mrb[0].mxu0
  %v104 = vpop.f32.mrb[0].mxu0
  %105 = vdwg.mxu0
  %v106 = vmax.f32 %v101, 0.0
  %v107 = vpack.c.bf16 %v106, %v106
  %v108 = vld [vmem:[%s3] sm:$0xf]
  %v109 = vld [vmem:[%s3 + $0x4] sm:$0xf]
  %v110 = vld [vmem:[%s3 + $0x8] sm:$0xf]
  %v111 = vld [vmem:[%s3 + $0xc] sm:$0xf]
  %v112 = vld [vmem:[%s3 + $0x10] sm:$0xf]
  %v113 = vld [vmem:[%s3 + $0x14] sm:$0xf]
  %v114 = vld [vmem:[%s3 + $0x18] sm:$0xf]
  %v115 = vld [vmem:[%s3 + $0x1c] sm:$0xf]
  %v116 = vld [vmem:[%s3 + $0x20] sm:$0xf]
  %v117 = vld [vmem:[%s3 + $0x24] sm:$0xf]
  %v118 = vld [vmem:[%s3 + $0x28] sm:$0xf]
  %v119 = vld [vmem:[%s3 + $0x2c] sm:$0xf]
  %v120 = vld [vmem:[%s3 + $0x30] sm:$0xf]
  %v121 = vld [vmem:[%s3 + $0x34] sm:$0xf]
  %v122 = vld [vmem:[%s3 + $0x38] sm:$0xf]
  %v123 = vld [vmem:[%s3 + $0x3c] sm:$0xf]
  %v124 = vld [vmem:[%s4] sm:$0x1]
  %v126 = vlaneseq
  %v127 = vshrl.u32 %v126, 7
  %v128 = vsub.s32 0, %v127
  %v129 = vrot.slane %v124, %v128
  %v147 = vunpack.c.l.b16 %v108
  %v148 = vunpack.c.l.b16 %v109
  %v149 = vunpack.c.l.b16 %v110
  %v150 = vunpack.c.l.b16 %v111
  %v151 = vunpack.c.l.b16 %v112
  %v152 = vunpack.c.l.b16 %v113
  %v153 = vunpack.c.l.b16 %v114
  %v154 = vunpack.c.l.b16 %v115
  %v155 = vunpack.c.l.b16 %v116
  %v156 = vunpack.c.l.b16 %v117
  %v157 = vunpack.c.l.b16 %v118
  %v158 = vunpack.c.l.b16 %v119
  %v159 = vunpack.c.l.b16 %v120
  %v160 = vunpack.c.l.b16 %v121
  %v161 = vunpack.c.l.b16 %v122
  %v162 = vunpack.c.l.b16 %v123
  %v163 = vpack.c.b16 %v148, %v147
  %v164 = vpack.c.b16 %v150, %v149
  %v165 = vpack.c.b16 %v152, %v151
  %v166 = vpack.c.b16 %v154, %v153
  %v167 = vpack.c.b16 %v156, %v155
  %v168 = vpack.c.b16 %v158, %v157
  %v169 = vpack.c.b16 %v160, %v159
  %v170 = vpack.c.b16 %v162, %v161
  %179 = vmatprep.subr.bf16.mxu0 0
  %180 = vmatpush1.bf16.msra.mxu0 %v163
  %181 = vmatprep.subr.bf16.mxu0 0
  %182 = vmatpush1.bf16.msra.mxu0 %v164
  %183 = vmatprep.subr.bf16.mxu0 0
  %184 = vmatpush1.bf16.msra.mxu0 %v165
  %185 = vmatprep.subr.bf16.mxu0 0
  %186 = vmatpush1.bf16.msra.mxu0 %v166
  %187 = vmatprep.subr.bf16.mxu0 0
  %188 = vmatpush1.bf16.msra.mxu0 %v167
  %189 = vmatprep.subr.bf16.mxu0 0
  %190 = vmatpush1.bf16.msra.mxu0 %v168
  %191 = vmatprep.subr.bf16.mxu0 0
  %192 = vmatpush1.bf16.msra.mxu0 %v169
  %193 = vmatprep.subr.bf16.mxu0 0
  %194 = vmatpush1.bf16.msra.mxu0 %v170
  %195 = vmatprep.subr.bf16.mxu0 0
  %196 = vmatpush1.bf16.msra.mxu0 0
  %197 = vmatprep.subr.bf16.mxu0 0
  %198 = vmatpush1.bf16.msra.mxu0 0
  %199 = vmatprep.subr.bf16.mxu0 0
  %200 = vmatpush1.bf16.msra.mxu0 0
  %201 = vmatprep.subr.bf16.mxu0 0
  %202 = vmatpush1.bf16.msra.mxu0 0
  %203 = vmatprep.subr.bf16.mxu0 0
  %204 = vmatpush1.bf16.msra.mxu0 0
  %205 = vmatprep.subr.bf16.mxu0 0
  %206 = vmatpush1.bf16.msra.mxu0 0
  %207 = vmatprep.subr.bf16.mxu0 0
  %208 = vmatpush1.bf16.msra.mxu0 0
  %209 = vmatprep.subr.bf16.mxu0 0
  %210 = vmatpush1.bf16.msra.mxu0 0
  %211 = vmatprep.mubr.bf16.mxu0 0
  %212 = vmatmul.mubr.bf16.gmra.mrb[0].mxu0 %v107
  %v213 = vpop.f32.mrb[0].mxu0
  %v214 = vadd.f32 %v129, %v213
  %v215 = vpop.f32.mrb[0].mxu0
  %v216 = vpop.f32.mrb[0].mxu0
  %v217 = vpop.f32.mrb[0].mxu0
  %218 = vdwg.mxu0
  %v219 = vmax.f32 %v214, 0.0
  %v220 = vld [vmem:[%s5] sm:$0x3]
  %v221 = vlaneseq
  %v222 = vshrl.u32 %v221, 7
  %v223 = vsub.s32 0, %v222
  %v224 = vrot.slane %v220, %v223
  %v225 = vmul.f32 %v219, %v224
  %vm226 = vcmask 523264
  %v227 = vsel %vm226, %v225, 0.0
  %228 = vadd.xlane.f32.xlu0 %v227
  %v229 = vpop.xlane.xlu0 %228
  %v230 = vlaneseq
  %v231 = vshrl.u32 %v230, 7
  %v232 = vsub.s32 1, %v231
  %v233 = vrot.slane %v220, %v232
  %v234 = vmul.f32 %v219, %v233
  %v235 = vsel %vm226, %v234, 0.0
  %236 = vadd.xlane.f32.xlu0 %v235
  %v237 = vpop.xlane.xlu0 %236
  %v239 = vlaneseq
  %v240 = vand.u32 %v239, 127
  %v241 = vlaneseq
  %v242 = vshrl.u32 %v241, 7
  %v243 = vsub.s32 %v240, %v242
  %v244 = vrot.slane %v229, %v243
  %v247 = vlaneseq
  %v248 = vshrl.u32 %v247, 7
  %v249 = vsub.s32 %v240, %v248
  %v250 = vrot.slane %v237, %v249
  %vm252 = vcmask 1040384
  %v253 = vsel %vm252, %v244, %v250
  %v254 = vld [vmem:[#allocation2] sm:$0x1]
  %v256 = vlaneseq
  %v257 = vshrl.u32 %v256, 7
  %v258 = vsub.s32 0, %v257
  %v259 = vrot.slane %v254, %v258
  %260 = vset.pattern.permute.xlu0 0
  %261 = vperm.xlu0 %260, %v259
  %v262 = vpop.permute.xlu0 %261
  %v264 = vadd.f32 %v253, %v262
  %vm265 = vcmask 58368
  %266 = vst.msk [vmem:[%s7] sm:$0x3] %vm265, %v264
  // Predicated region
  $region30: #{trading_model_forward.1} parent=0 // pred_check
    _
  $region31: #{trading_model_forward.1} parent=0 // pred_check_branch
    %268 = sbr.rel (0) target = $region33
  $region32: #{trading_model_forward.1} parent=0 // pred_region
    _
  $region33: #{trading_model_forward.1} parent=0 // pred_fallthru
    _
  // Predicated region
  $region34: #{trading_model_forward.1} parent=0 // pred_check
    _
  $region35: #{trading_model_forward.1} parent=0 // pred_check_branch
    %270 = sbr.rel (0) target = $region37
  $region36: #{trading_model_forward.1} parent=0 // pred_region
    _
  $region37: #{trading_model_forward.1} parent=0 // pred_fallthru
    _

</llo_original>
